<compile_context>
chip_gen: v6e
topology: v6e:2x2x1
jax: 0.10.0
libtpu: 0.0.40
codegen_flags: <defaults>
</compile_context>

<pallas_src>
import math
from abc import abstractmethod

import jax
import jax.numpy as jnp
from jax import lax
from jax.experimental import pallas as pl
from jax.experimental.pallas import tpu as pltpu

_LANES = 128
_SUBLANES = 8
_ALIGN = _LANES * _SUBLANES          # 1024 elements = one (8, 128) f32 tile
_EPS = 1e-6


def _target_tile_bytes() -> int:
    """Per-input DMA tile size; 2 inputs x 2 pipeline buffers must stay well
    inside scoped VMEM on every generation (v7x has only 64 MiB physical)."""
    try:
        vmem = pltpu.get_tpu_info().vmem_capacity_bytes
    except Exception:
        vmem = 64 * 1024 * 1024      # conservative (v7x-sized) default
    return (8 if vmem >= 96 * 1024 * 1024 else 4) * 1024 * 1024


# ----------------------------------------------------------------------------
# Pallas kernel: streaming reduction of (sum(x*t), sum(x), sum(t)) into a
# per-split (3, 8, 128) output block (output acts as the accumulator).
# ----------------------------------------------------------------------------
def _make_dice_kernel(*, block_rows, chunk_rows, n_chunks, bps, total_blocks,
                      valid_rows, ragged, all_fast, unroll):
    folds = chunk_rows // _SUBLANES

    def kernel(x_ref, t_ref, o_ref):
        i = pl.program_id(1)
        g = pl.program_id(0) * bps + i          # global (unclamped) block index

        @pl.when(i == 0)
        def _init():
            o_ref[...] = jnp.zeros_like(o_ref)

        def accumulate(masked):
            def chunk(j, carry):
                a_xt, a_x, a_t = carry
                base = pl.multiple_of(j * chunk_rows, chunk_rows)
                xc = x_ref[pl.ds(base, chunk_rows), :].astype(jnp.float32)
                tc = t_ref[pl.ds(base, chunk_rows), :].astype(jnp.float32)
                if masked:
                    # Row-granularity mask; only ever runs on the last block.
                    r = (g * block_rows + base
                         + lax.broadcasted_iota(jnp.int32, (chunk_rows, 1), 0))
                    ok = r < valid_rows
                    xc = jnp.where(ok, xc, 0.0)
                    tc = jnp.where(ok, tc, 0.0)
                xf = xc.reshape(folds, _SUBLANES, _LANES)
                tf = tc.reshape(folds, _SUBLANES, _LANES)
                # One pass over the chunk: x/t vregs feed all three sums.
                return (a_xt + jnp.sum(xf * tf, axis=0),
                        a_x + jnp.sum(xf, axis=0),
                        a_t + jnp.sum(tf, axis=0))

            a_xt, a_x, a_t = lax.fori_loop(
                0, n_chunks, chunk, (o_ref[0], o_ref[1], o_ref[2]),
                unroll=unroll)
            o_ref[0] = a_xt
            o_ref[1] = a_x
            o_ref[2] = a_t

        if all_fast:
            accumulate(False)                   # no mask, no duplicates
        else:
            fast_limit = total_blocks - 1 if ragged else total_blocks

            @pl.when(g < fast_limit)
            def _fast():
                accumulate(False)

            if ragged:
                @pl.when(g == total_blocks - 1)
                def _last():
                    accumulate(True)
            # g >= total_blocks: duplicate (clamped) block -> contributes 0.

    return kernel


def _soft_dice_loss_pallas(inp, tgt, *, block_rows=None):
    """Soft Dice loss over ALL elements (N, C, H, W collapsed), Pallas reduction."""
    assert inp.shape == tgt.shape, "input/target shape mismatch"
    total = math.prod(inp.shape)
    x = jnp.ravel(inp)
    t = jnp.ravel(tgt)

    s_xt = jnp.float32(0.0)
    s_x = jnp.float32(0.0)
    s_t = jnp.float32(0.0)

    rows = total // _LANES
    aligned = rows * _LANES
    tail_start = 0

    if total >= _ALIGN:
        itemsize = jnp.dtype(inp.dtype).itemsize
        if block_rows is None:
            block_rows = _target_tile_bytes() // (_LANES * itemsize)
        rows_pad8 = ((rows + _SUBLANES - 1) // _SUBLANES) * _SUBLANES
        block_rows = max(_SUBLANES, min(block_rows, rows_pad8))   # multiple of 8

        chunk_rows = _SUBLANES
        for c in (64, 32, 16):
            if block_rows % c == 0:
                chunk_rows = c
                break
        n_chunks = block_rows // chunk_rows
        unroll = 1
        for u in (8, 4, 2):
            if n_chunks >= u and n_chunks % u == 0:
                unroll = u
                break

        total_blocks = pl.cdiv(rows, block_rows)
        n_splits = 2 if total_blocks >= 2 else 1    # dual-TC split (v7x megacore)
        bps = pl.cdiv(total_blocks, n_splits)
        ragged = (rows % block_rows) != 0
        all_fast = (not ragged) and (n_splits * bps == total_blocks)

        # Free reshape when total % 128 == 0; otherwise only the aligned
        # prefix is sliced (the <128-element tail is folded in below).
        xp = x if aligned == total else x[:aligned]
        tp = t if aligned == total else t[:aligned]
        x2 = xp.reshape(rows, _LANES)
        t2 = tp.reshape(rows, _LANES)

        kernel = _make_dice_kernel(
            block_rows=block_rows, chunk_rows=chunk_rows, n_chunks=n_chunks,
            bps=bps, total_blocks=total_blocks, valid_rows=rows,
            ragged=ragged, all_fast=all_fast, unroll=unroll)

        if all_fast:
            in_map = lambda s, i: (s * bps + i, 0)
        else:
            # Clamp so duplicate / ragged block indices never DMA out of bounds;
            # the in-kernel mask / skip keeps their contribution at zero.
            in_map = lambda s, i: (jnp.minimum(s * bps + i, total_blocks - 1), 0)

        tile_bytes = block_rows * _LANES * itemsize
        vmem_limit = int(max(32 * 1024 * 1024, 4 * tile_bytes + 8 * 1024 * 1024))

        parts = pl.pallas_call(
            kernel,
            out_shape=jax.ShapeDtypeStruct((n_splits, 3, _SUBLANES, _LANES),
                                           jnp.float32),
            grid_spec=pltpu.PrefetchScalarGridSpec(
                num_scalar_prefetch=0,
                grid=(n_splits, bps),
                in_specs=[
                    pl.BlockSpec((block_rows, _LANES), in_map),
                    pl.BlockSpec((block_rows, _LANES), in_map),
                ],
                out_specs=pl.BlockSpec((None, 3, _SUBLANES, _LANES),
                                       lambda s, i: (s, 0, 0, 0)),
            ),
            compiler_params=pltpu.CompilerParams(
                dimension_semantics=("parallel", "arbitrary"),
                vmem_limit_bytes=vmem_limit,
            ),
            cost_estimate=pl.CostEstimate(
                flops=4 * aligned,
                transcendentals=0,
                bytes_accessed=2 * aligned * itemsize
                + n_splits * 3 * _SUBLANES * _LANES * 4,
            ),
        )(x2, t2)

        sums = jnp.sum(parts, axis=(0, 2, 3))       # tiny finalize in wrapper
        s_xt, s_x, s_t = sums[0], sums[1], sums[2]
        tail_start = aligned

    if tail_start < total:
        # <128-element ragged tail (or sub-1024 degenerate input): plain JAX.
        xt = x[tail_start:].astype(jnp.float32)
        tt = t[tail_start:].astype(jnp.float32)
        s_xt = s_xt + jnp.sum(xt * tt)
        s_x = s_x + jnp.sum(xt)
        s_t = s_t + jnp.sum(tt)

    eps = jnp.float32(_EPS)
    dice = (2.0 * s_xt + eps) / (s_x + s_t + eps)
    return jnp.float32(1.0) - dice


# ----------------------------------------------------------------------------
# Module translation
# ----------------------------------------------------------------------------
class LossBase:
    """分割常用损失函数 (segmentation loss base). Mirrors the PyTorch module:
    forward(input, target) -> cal_loss(input, target)."""

    def __init__(self):
        super().__init__()

    def __call__(self, input, target):
        return self.forward(input, target)

    def forward(self, input, target):
        return self.cal_loss(input, target)

    @staticmethod
    @abstractmethod
    def cal_loss(input, target):
        # TODO(synk): cal_loss is abstract in the PyTorch source; no concrete
        # math is defined there — concrete subclasses supply the Pallas kernel.
        raise NotImplementedError


class PallasSoftDiceLoss(LossBase):
    """Concrete instantiation of LossBase whose hot path (global reductions)
    runs in a Pallas TPU kernel."""

    @staticmethod
    def cal_loss(input, target):
        return _soft_dice_loss_pallas(input, target)


if __name__ == "__main__":
    key = jax.random.PRNGKey(0)
    k1, k2, k3, k4, k5, k6, k7, k8 = jax.random.split(key, 8)

    def _ref(p, t):
        p = p.astype(jnp.float32)
        t = t.astype(jnp.float32)
        eps = 1e-6
        return 1.0 - (2.0 * jnp.sum(p * t) + eps) / (jnp.sum(p) + jnp.sum(t) + eps)

    loss_fn = PallasSoftDiceLoss()

    # Small NCHW shapes typical of a segmentation loss (single block, grid (1,1)).
    N, C, H, W = 2, 4, 16, 16
    probs = jax.nn.sigmoid(jax.random.normal(k1, (N, C, H, W), jnp.float32))
    target = (jax.random.uniform(k2, (N, C, H, W)) > 0.5).astype(jnp.float32)
    loss = jax.block_until_ready(loss_fn(probs, target))
    assert jnp.allclose(loss, _ref(probs, target), rtol=1e-5, atol=1e-5), loss

    # Multi-block + dual-split + ragged-last-block path (small forced tiles:
    # grid (2, 3), one masked block, one clamped duplicate block).
    p2 = jax.nn.sigmoid(jax.random.normal(k3, (1, 2, 300, 128), jnp.float32))
    t2 = (jax.random.uniform(k4, (1, 2, 300, 128)) > 0.5).astype(jnp.float32)
    loss2 = jax.block_until_ready(_soft_dice_loss_pallas(p2, t2, block_rows=128))
    assert jnp.allclose(loss2, _ref(p2, t2), rtol=1e-5, atol=1e-5), loss2

    # Total not a multiple of 128: aligned prefix in-kernel + tiny plain-JAX tail.
    p3 = jax.nn.sigmoid(jax.random.normal(k5, (2, 3, 17, 19), jnp.float32))
    t3 = (jax.random.uniform(k6, (2, 3, 17, 19)) > 0.5).astype(jnp.float32)
    loss3 = jax.block_until_ready(loss_fn(p3, t3))
    assert jnp.allclose(loss3, _ref(p3, t3), rtol=1e-5, atol=1e-5), loss3

    # bf16 inputs: per-tile cast to f32 happens in-register inside the kernel.
    p4 = jax.nn.sigmoid(jax.random.normal(k7, (N, C, H, W), jnp.float32)).astype(jnp.bfloat16)
    t4 = (jax.random.uniform(k8, (N, C, H, W)) > 0.5).astype(jnp.bfloat16)
    loss4 = jax.block_until_ready(loss_fn(p4, t4))
    assert jnp.allclose(loss4, _ref(p4, t4), rtol=1e-3, atol=1e-3), loss4

    print("KERNEL_OK")
</pallas_src>

<mosaic_0001>
module attributes {stable_mosaic.version = 11 : i64} {
  func.func @kernel(%arg0: i32, %arg1: i32, %arg2: memref<16x128xf32, #tpu.memory_space<vmem>>, %arg3: memref<16x128xf32, #tpu.memory_space<vmem>>, %arg4: memref<1x3x8x128xf32, #tpu.memory_space<vmem>>) attributes {dimension_semantics = [#tpu.dimension_semantics<parallel>, #tpu.dimension_semantics<arbitrary>], iteration_bounds = array<i64: 1, 1>, scalar_prefetch = 0 : i64, scratch_operands = 0 : i64, tpu.core_type = #tpu.core_type<tc>, window_params = [{transform_indices = @transform_0, window_bounds = array<i64: 16, 128>}, {transform_indices = @transform_1, window_bounds = array<i64: 16, 128>}, {transform_indices = @transform_2, window_bounds = array<i64: 1, 3, 8, 128>}]} {
    %c0_i32 = arith.constant 0 : i32
    %0 = arith.cmpi eq, %arg1, %c0_i32 : i32
    %1 = arith.extui %0 : i1 to i32
    %c0_i32_0 = arith.constant 0 : i32
    %2 = arith.cmpi ne, %1, %c0_i32_0 : i32
    scf.if %2 {
      %cst_27 = arith.constant 0.000000e+00 : f32
      %33 = vector.broadcast %cst_27 : f32 to vector<3x8x128xf32>
      %c0_28 = arith.constant 0 : index
      %c0_29 = arith.constant 0 : index
      %c0_30 = arith.constant 0 : index
      %c0_31 = arith.constant 0 : index
      %34 = vector.load %arg4[%c0_28, %c0_29, %c0_30, %c0_31] : memref<1x3x8x128xf32, #tpu.memory_space<vmem>>, vector<1x3x8x128xf32>
      %35 = vector.shape_cast %34 : vector<1x3x8x128xf32> to vector<3x8x128xf32>
      %36 = vector.shape_cast %33 : vector<3x8x128xf32> to vector<1x3x8x128xf32>
      tpu.vector_store %arg4[%c0_28, %c0_29, %c0_30, %c0_31], %36 {strides = array<i32>} : memref<1x3x8x128xf32, #tpu.memory_space<vmem>>, vector<1x3x8x128xf32>,
    } else {
    }
    %c0 = arith.constant 0 : index
    %c0_1 = arith.constant 0 : index
    %c0_2 = arith.constant 0 : index
    %c0_3 = arith.constant 0 : index
    %3 = vector.load %arg4[%c0, %c0_1, %c0_2, %c0_3] : memref<1x3x8x128xf32, #tpu.memory_space<vmem>>, vector<1x1x8x128xf32>
    %4 = vector.shape_cast %3 : vector<1x1x8x128xf32> to vector<8x128xf32>
    %c0_4 = arith.constant 0 : index
    %c1 = arith.constant 1 : index
    %c0_5 = arith.constant 0 : index
    %c0_6 = arith.constant 0 : index
    %5 = vector.load %arg4[%c0_4, %c1, %c0_5, %c0_6] : memref<1x3x8x128xf32, #tpu.memory_space<vmem>>, vector<1x1x8x128xf32>
    %6 = vector.shape_cast %5 : vector<1x1x8x128xf32> to vector<8x128xf32>
    %c0_7 = arith.constant 0 : index
    %c2 = arith.constant 2 : index
    %c0_8 = arith.constant 0 : index
    %c0_9 = arith.constant 0 : index
    %7 = vector.load %arg4[%c0_7, %c2, %c0_8, %c0_9] : memref<1x3x8x128xf32, #tpu.memory_space<vmem>>, vector<1x1x8x128xf32>
    %8 = vector.shape_cast %7 : vector<1x1x8x128xf32> to vector<8x128xf32>
    %c0_i32_10 = arith.constant 0 : i32
    %c16_i32 = arith.constant 16 : i32
    %9 = arith.muli %c0_i32_10, %c16_i32 : i32
    %10 = tpu.assume_multiple %9, 16 : i32
    %11 = arith.index_cast %10 : i32 to index
    %c0_11 = arith.constant 0 : index
    %12 = vector.load %arg2[%11, %c0_11] : memref<16x128xf32, #tpu.memory_space<vmem>>, vector<16x128xf32>
    %13 = arith.index_cast %10 : i32 to index
    %c0_12 = arith.constant 0 : index
    %14 = vector.load %arg3[%13, %c0_12] : memref<16x128xf32, #tpu.memory_space<vmem>>, vector<16x128xf32>
    %15 = vector.shape_cast %12 : vector<16x128xf32> to vector<2x8x128xf32>
    %16 = vector.shape_cast %14 : vector<16x128xf32> to vector<2x8x128xf32>
    %17 = arith.mulf %15, %16 : vector<2x8x128xf32>
    %cst = arith.constant dense<0.000000e+00> : vector<8x128xf32>
    %18 = vector.multi_reduction <add>, %17, %cst [0] : vector<2x8x128xf32> to vector<8x128xf32>
    %19 = arith.addf %4, %18 : vector<8x128xf32>
    %cst_13 = arith.constant dense<0.000000e+00> : vector<8x128xf32>
    %20 = vector.multi_reduction <add>, %15, %cst_13 [0] : vector<2x8x128xf32> to vector<8x128xf32>
    %21 = arith.addf %6, %20 : vector<8x128xf32>
    %cst_14 = arith.constant dense<0.000000e+00> : vector<8x128xf32>
    %22 = vector.multi_reduction <add>, %16, %cst_14 [0] : vector<2x8x128xf32> to vector<8x128xf32>
    %23 = arith.addf %8, %22 : vector<8x128xf32>
    %c1_i32 = arith.constant 1 : i32
    %c0_15 = arith.constant 0 : index
    %c0_16 = arith.constant 0 : index
    %c0_17 = arith.constant 0 : index
    %c0_18 = arith.constant 0 : index
    %24 = vector.load %arg4[%c0_15, %c0_16, %c0_17, %c0_18] : memref<1x3x8x128xf32, #tpu.memory_space<vmem>>, vector<1x1x8x128xf32>
    %25 = vector.shape_cast %24 : vector<1x1x8x128xf32> to vector<8x128xf32>
    %26 = vector.shape_cast %19 : vector<8x128xf32> to vector<1x1x8x128xf32>
    tpu.vector_store %arg4[%c0_15, %c0_16, %c0_17, %c0_18], %26 {strides = array<i32>} : memref<1x3x8x128xf32, #tpu.memory_space<vmem>>, vector<1x1x8x128xf32>,
    %c0_19 = arith.constant 0 : index
    %c1_20 = arith.constant 1 : index
    %c0_21 = arith.constant 0 : index
    %c0_22 = arith.constant 0 : index
    %27 = vector.load %arg4[%c0_19, %c1_20, %c0_21, %c0_22] : memref<1x3x8x128xf32, #tpu.memory_space<vmem>>, vector<1x1x8x128xf32>
    %28 = vector.shape_cast %27 : vector<1x1x8x128xf32> to vector<8x128xf32>
    %29 = vector.shape_cast %21 : vector<8x128xf32> to vector<1x1x8x128xf32>
    tpu.vector_store %arg4[%c0_19, %c1_20, %c0_21, %c0_22], %29 {strides = array<i32>} : memref<1x3x8x128xf32, #tpu.memory_space<vmem>>, vector<1x1x8x128xf32>,
    %c0_23 = arith.constant 0 : index
    %c2_24 = arith.constant 2 : index
    %c0_25 = arith.constant 0 : index
    %c0_26 = arith.constant 0 : index
    %30 = vector.load %arg4[%c0_23, %c2_24, %c0_25, %c0_26] : memref<1x3x8x128xf32, #tpu.memory_space<vmem>>, vector<1x1x8x128xf32>
    %31 = vector.shape_cast %30 : vector<1x1x8x128xf32> to vector<8x128xf32>
    %32 = vector.shape_cast %23 : vector<8x128xf32> to vector<1x1x8x128xf32>
    tpu.vector_store %arg4[%c0_23, %c2_24, %c0_25, %c0_26], %32 {strides = array<i32>} : memref<1x3x8x128xf32, #tpu.memory_space<vmem>>, vector<1x1x8x128xf32>,
    return
  }
  func.func @transform_0(%arg0: i32, %arg1: i32) -> (i32, i32) {
    %c1_i32 = arith.constant 1 : i32
    %0 = arith.muli %arg0, %c1_i32 : i32
    %1 = arith.addi %0, %arg1 : i32
    %c0_i32 = arith.constant 0 : i32
    %c0_i32_0 = arith.constant 0 : i32
    return %1, %c0_i32 : i32, i32
  }
  func.func @transform_1(%arg0: i32, %arg1: i32) -> (i32, i32) {
    %c1_i32 = arith.constant 1 : i32
    %0 = arith.muli %arg0, %c1_i32 : i32
    %1 = arith.addi %0, %arg1 : i32
    %c0_i32 = arith.constant 0 : i32
    %c0_i32_0 = arith.constant 0 : i32
    return %1, %c0_i32 : i32, i32
  }
  func.func @transform_2(%arg0: i32, %arg1: i32) -> (i32, i32, i32, i32) {
    %c0_i32 = arith.constant 0 : i32
    %c0_i32_0 = arith.constant 0 : i32
    %c0_i32_1 = arith.constant 0 : i32
    %c0_i32_2 = arith.constant 0 : i32
    return %arg0, %c0_i32, %c0_i32_0, %c0_i32_1 : i32, i32, i32, i32
  }
}

</mosaic_0001>

<llo_original>
// kernel: tpu_custom_call.1
$region0: #{tpu_custom_call.1}
  #allocation0 [shape = 'u32[]', space=smem, size = 0x4, offset = 0x4, fixed_abs, tag = 'smem constant byte address 0x4 - core index']
  #allocation1 [shape = 'u32[144,128]{1,0:T(1,128)}', space=vmem, size = 0x12000, scoped, tag = 'internal scratch']
  %s0 = inlined_call_operand.hbm [shape: f32[16,128], index: 0, kind: input, shape index: {}]
  %s1 = inlined_call_operand.hbm [shape: f32[16,128], index: 1, kind: input, shape index: {}]
  %s2 = inlined_call_operand.hbm [shape: f32[1,3,8,128], index: 2, kind: output, shape index: {}]
  %s3 = sld [smem:[#allocation0]]
  $region30: #{tpu_custom_call.1} parent=0
    _
  %s5 = ssub.s32 1, %s3
  %s6 = scalar_select 0, %s5, %s3
  $region1: #{tpu_custom_call.1} parent=0
    #allocation2 [shape = 'u8[8192]{0}', space=vmem, size = 0x2000, scoped, tag = 'input window, operand 0, single buffered']
    #allocation3 [shape = 's32[1]{0}', space=sflag, size = 0x4, scoped, tag = 'scoped memory for tpu_custom_call.1']
    #allocation4 [shape = 's32[1]{0}', space=sflag, size = 0x4, scoped, tag = 'scoped memory for tpu_custom_call.1']
    #allocation5 [shape = 'u8[8192]{0}', space=vmem, size = 0x2000, scoped, tag = 'input window, operand 1, single buffered']
    #allocation6 [shape = 's32[1]{0}', space=sflag, size = 0x4, scoped, tag = 'scoped memory for tpu_custom_call.1']
    #allocation7 [shape = 'u8[12288]{0}', space=vmem, size = 0x3000, scoped, tag = 'output window, operand 0, single buffered']
    %7 = vsyncpa [#allocation3], 0
    %8 = vsyncpa [#allocation6], 0
    %9 = vsyncpa [#allocation4], 0
    // Predicated region
    $region2: #{tpu_custom_call.1} parent=1 // pred_check
      _
    $region3: #{tpu_custom_call.1} parent=1 // pred_check_branch
      %11 = sbr.rel (0) target = $region5
    $region4: #{tpu_custom_call.1} parent=1 // pred_region
      %s12 = sadd.s32 0, 0
      %s13 = smul.u32 2, %s12
      %s15 = ssub.s32 256, 256
      %16 = vsyncadd [#allocation3], %s15
      %s17 = smul.addr %s13, 128
      %s18 = scalar_lea.hbm %s0, %s17
      %s19 = sshll.u32 [#allocation2], 4
      %s20 = int_to_ptr.vmem [resolvable:$true] %s19
      %25 = dma.hbm_to_vmem [thread:$0]  %s18, 256, %s20, [#allocation3], 128, 128, 8
    $region5: #{tpu_custom_call.1} parent=1 // pred_fallthru
      _
    // Predicated region
    $region6: #{tpu_custom_call.1} parent=1 // pred_check
      _
    $region7: #{tpu_custom_call.1} parent=1 // pred_check_branch
      %27 = sbr.rel (0) target = $region9
    $region8: #{tpu_custom_call.1} parent=1 // pred_region
      %s28 = sadd.s32 0, 0
      %s29 = smul.u32 2, %s28
      %s31 = ssub.s32 256, 256
      %32 = vsyncadd [#allocation6], %s31
      %s33 = smul.addr %s29, 128
      %s34 = scalar_lea.hbm %s1, %s33
      %s35 = sshll.u32 [#allocation5], 4
      %s36 = int_to_ptr.vmem [resolvable:$true] %s35
      %41 = dma.hbm_to_vmem [thread:$0]  %s34, 256, %s36, [#allocation6], 128, 128, 8
    $region9: #{tpu_custom_call.1} parent=1 // pred_fallthru
      _
    // Predicated region
    $region10: #{tpu_custom_call.1} parent=1 // pred_check
      _
    $region11: #{tpu_custom_call.1} parent=1 // pred_check_branch
      %43 = sbr.rel (0) target = $region13
    $region12: #{tpu_custom_call.1} parent=1 // pred_region
      %44 = dma.done [#allocation3], 256
    $region13: #{tpu_custom_call.1} parent=1 // pred_fallthru
      _
    // Predicated region
    $region14: #{tpu_custom_call.1} parent=1 // pred_check
      _
    $region15: #{tpu_custom_call.1} parent=1 // pred_check_branch
      %46 = sbr.rel (0) target = $region17
    $region16: #{tpu_custom_call.1} parent=1 // pred_region
      %47 = dma.done [#allocation6], 256
    $region17: #{tpu_custom_call.1} parent=1 // pred_fallthru
      _
    %s48 = sadd.s32 0, 0
    %s49 = smul.u32 2, %s48
    %s50 = sadd.s32 0, 0
    %s51 = smul.u32 2, %s50
    %p52 = scmp.eq.s32.totalorder 0, 0
    // Predicated region
    $region18: #{tpu_custom_call.1} parent=1 // pred_check
      %p53 = pneg %p52
    $region19: #{tpu_custom_call.1} parent=1 // pred_check_branch
      %55 = sbr.rel (%p53) target = $region21
    $region20: #{tpu_custom_call.1} parent=1 // pred_region
      %56 = vst [vmem:[#allocation7] sm:$0xff] 0.0
      %57 = vst [vmem:[#allocation7 + $0x8] sm:$0xff] 0.0
      %58 = vst [vmem:[#allocation7 + $0x10] sm:$0xff] 0.0
    $region21: #{tpu_custom_call.1} parent=1 // pred_fallthru
      _
    %v59 = vld [vmem:[#allocation7] sm:$0xff]
    %s60 = scalar_lea.vmem [#allocation7], 8
    %v61 = vld [vmem:[%s60] sm:$0xff]
    %s62 = scalar_lea.vmem [#allocation7], 16
    %v63 = vld [vmem:[%s62] sm:$0xff]
    %v64 = vld [vmem:[#allocation2] sm:$0xff]
    %v65 = vld [vmem:[#allocation2 + $0x8] sm:$0xff]
    %v66 = vld [vmem:[#allocation5] sm:$0xff]
    %v67 = vld [vmem:[#allocation5 + $0x8] sm:$0xff]
    %v68 = vmul.f32 %v64, %v66
    %v69 = vmul.f32 %v65, %v67
    %v70 = vadd.f32 %v68, %v69
    %v71 = vadd.f32 %v59, %v70
    %v72 = vadd.f32 %v64, %v65
    %v73 = vadd.f32 %v61, %v72
    %v74 = vadd.f32 %v66, %v67
    %v75 = vadd.f32 %v63, %v74
    %76 = vst [vmem:[#allocation7] sm:$0xff] %v71
    %77 = vst [vmem:[%s60] sm:$0xff] %v73
    %78 = vst [vmem:[%s62] sm:$0xff] %v75
    // Predicated region
    $region22: #{tpu_custom_call.1} parent=1 // pred_check
      _
    $region23: #{tpu_custom_call.1} parent=1 // pred_check_branch
      %80 = sbr.rel (0) target = $region25
    $region24: #{tpu_custom_call.1} parent=1 // pred_region
      %s82 = ssub.s32 384, 384
      %83 = vsyncadd [#allocation4], %s82
      %s84 = sshll.u32 [#allocation7], 4
      %s85 = int_to_ptr.vmem [resolvable:$true] %s84
      %90 = dma.vmem_to_hbm [thread:$0]  %s85, 384, %s2, [#allocation4], 128, 128, 8
    $region25: #{tpu_custom_call.1} parent=1 // pred_fallthru
      _
    // Predicated region
    $region26: #{tpu_custom_call.1} parent=1 // pred_check
      _
    $region27: #{tpu_custom_call.1} parent=1 // pred_check_branch
      %92 = sbr.rel (0) target = $region29
    $region28: #{tpu_custom_call.1} parent=1 // pred_region
      %93 = dma.done [#allocation4], 384
    $region29: #{tpu_custom_call.1} parent=1 // pred_fallthru
      _
    %94 = vsyncpa [#allocation3], 1
    %95 = vsyncpa [#allocation6], 1
    %96 = vsyncpa [#allocation4], 1

</llo_original>
